<compile_context>
chip_gen: v5e
topology: v5e:2x2
jax: 0.10.0
libtpu: 0.0.40
codegen_flags: <defaults>
</compile_context>

<pallas_src>
import functools
import math

import jax
import jax.numpy as jnp
from jax.experimental import pallas as pl
from jax.experimental.pallas import tpu as pltpu


def _time_embed_kernel(t_ref, w1_ref, b1_ref, w2_ref, b2_ref, o_ref,
                       *, half_dim: int, log_coef: float):
    dim4 = 2 * half_dim

    t = t_ref[...]                                              # (TB, 1)

    # Hoisted sinusoid constants, built once per tile at (1, dim4):
    #   col <  half_dim : phase 0      (sin branch)
    #   col >= half_dim : phase pi/2   (cos branch, cos(x) = sin(x + pi/2))
    col = jax.lax.broadcasted_iota(jnp.int32, (1, dim4), 1)
    is_sin = col < half_dim
    fidx = jnp.where(is_sin, col, col - half_dim).astype(jnp.float32)
    freqs = jnp.exp(fidx * (-log_coef))                         # (1, dim4)
    phase = jnp.where(is_sin, 0.0, jnp.float32(0.5 * math.pi))  # (1, dim4)

    emb = jnp.sin(t * freqs + phase)                            # (TB, dim4)

    # lin1 -> sigmoid -> lin2; MXU matmuls with f32 accumulation.
    h = jnp.dot(emb, w1_ref[...], preferred_element_type=jnp.float32) + b1_ref[...]
    h = 0.5 * (jnp.tanh(0.5 * h) + 1.0)                         # sigmoid via EUP tanh
    out = jnp.dot(h, w2_ref[...], preferred_element_type=jnp.float32) + b2_ref[...]
    o_ref[...] = out.astype(o_ref.dtype)


def _round_up(x: int, m: int) -> int:
    return (x + m - 1) // m * m


def time_embed_forward(t, w1, b1, w2, b2, *, dim: int, max_tile: int = 1024):
    """t: (B,) float32. Weights stored (in_features, out_features)."""
    B = t.shape[0]
    half_dim = dim // 8
    dim4 = dim // 4
    assert half_dim >= 2, "dim must be >= 16 (log(10000)/(half_dim-1) needs half_dim > 1)"
    assert w1.shape == (dim4, dim) and w2.shape == (dim, dim)
    log_coef = math.log(10000.0) / (half_dim - 1)

    # --- batch tiling: big sublane-aligned tiles, >=2 parallel steps when possible ---
    B_pad = _round_up(B, 8)
    if B_pad >= 16:
        # At least two grid steps (keeps both v7x TensorCores busy), capped so the
        # double-buffered output tile stays far under v5e's 16 MiB scoped VMEM.
        tb = min(max_tile, _round_up(pl.cdiv(B_pad, 2), 8))
    else:
        tb = B_pad
    B_pad = _round_up(B_pad, tb)
    grid = (B_pad // tb,)

    t2 = t.reshape(B, 1).astype(jnp.float32)
    if B_pad != B:
        t2 = jnp.pad(t2, ((0, B_pad - B), (0, 0)))

    kernel = functools.partial(_time_embed_kernel,
                               half_dim=half_dim, log_coef=log_coef)

    out = pl.pallas_call(
        kernel,
        out_shape=jax.ShapeDtypeStruct((B_pad, dim), jnp.float32),
        grid_spec=pltpu.PrefetchScalarGridSpec(
            num_scalar_prefetch=0,
            grid=grid,
            in_specs=[
                pl.BlockSpec((tb, 1), lambda i: (i, 0)),        # t
                pl.BlockSpec((dim4, dim), lambda i: (0, 0)),    # w1 (resident)
                pl.BlockSpec((1, dim), lambda i: (0, 0)),       # b1 (resident)
                pl.BlockSpec((dim, dim), lambda i: (0, 0)),     # w2 (resident)
                pl.BlockSpec((1, dim), lambda i: (0, 0)),       # b2 (resident)
            ],
            out_specs=pl.BlockSpec((tb, dim), lambda i: (i, 0)),
        ),
        compiler_params=pltpu.CompilerParams(
            dimension_semantics=("parallel",)),
    )(t2, w1, b1.reshape(1, dim), w2, b2.reshape(1, dim))

    return out[:B] if B_pad != B else out


def _reference(t, w1, b1, w2, b2, *, dim):
    half_dim = dim // 8
    coef = math.log(10000.0) / (half_dim - 1)
    freqs = jnp.exp(jnp.arange(half_dim, dtype=jnp.float32) * -coef)
    e = t[:, None] * freqs[None, :]
    e = jnp.concatenate([jnp.sin(e), jnp.cos(e)], axis=1)
    h = jax.nn.sigmoid(e @ w1 + b1)
    return h @ w2 + b2


if __name__ == "__main__":
    # Module-consistent small shapes: dim=128 -> half_dim=16, lin1 in = 32.
    dim = 128
    dim4 = dim // 4

    key = jax.random.PRNGKey(0)
    kt, kw1, kb1, kw2, kb2 = jax.random.split(key, 5)

    # Deterministic Linear-style init (uniform +/- 1/sqrt(fan_in)); weights stored (in, out).
    lim1 = 1.0 / (dim4 ** 0.5)
    w1 = jax.random.uniform(kw1, (dim4, dim), jnp.float32, -lim1, lim1)
    b1 = jax.random.uniform(kb1, (dim,), jnp.float32, -lim1, lim1)
    lim2 = 1.0 / (dim ** 0.5)
    w2 = jax.random.uniform(kw2, (dim, dim), jnp.float32, -lim2, lim2)
    b2 = jax.random.uniform(kb2, (dim,), jnp.float32, -lim2, lim2)

    # Two cases: aligned small batch, and an unaligned batch exercising the
    # padding + multi-step (>=2 parallel grid steps) path.
    for B in (8, 20):
        t = jax.random.uniform(jax.random.fold_in(kt, B), (B,), jnp.float32, 0.0, 100.0)
        y = time_embed_forward(t, w1, b1, w2, b2, dim=dim)
        y = jax.block_until_ready(y)
        y_ref = _reference(t, w1, b1, w2, b2, dim=dim)
        assert y.shape == (B, dim)
        assert jnp.allclose(y, y_ref, atol=1e-3, rtol=1e-3), f"mismatch vs reference (B={B})"

    print("KERNEL_OK")
</pallas_src>

<mosaic_0001>
module attributes {stable_mosaic.version = 11 : i64} {
  func.func @_time_embed_kernel(%arg0: i32, %arg1: memref<8x1xf32, #tpu.memory_space<vmem>>, %arg2: memref<32x128xf32, #tpu.memory_space<vmem>>, %arg3: memref<1x128xf32, #tpu.memory_space<vmem>>, %arg4: memref<128x128xf32, #tpu.memory_space<vmem>>, %arg5: memref<1x128xf32, #tpu.memory_space<vmem>>, %arg6: memref<8x128xf32, #tpu.memory_space<vmem>>) attributes {dimension_semantics = [#tpu.dimension_semantics<parallel>], iteration_bounds = array<i64: 1>, scalar_prefetch = 0 : i64, scratch_operands = 0 : i64, tpu.core_type = #tpu.core_type<tc>, window_params = [{transform_indices = @transform_0, window_bounds = array<i64: 8, 1>}, {pipeline_mode = #tpu.pipeline_mode<synchronous>, transform_indices = @transform_1, window_bounds = array<i64: 32, 128>}, {pipeline_mode = #tpu.pipeline_mode<synchronous>, transform_indices = @transform_2, window_bounds = array<i64: 1, 128>}, {pipeline_mode = #tpu.pipeline_mode<synchronous>, transform_indices = @transform_3, window_bounds = array<i64: 128, 128>}, {pipeline_mode = #tpu.pipeline_mode<synchronous>, transform_indices = @transform_4, window_bounds = array<i64: 1, 128>}, {transform_indices = @transform_5, window_bounds = array<i64: 8, 128>}]} {
    %c0 = arith.constant 0 : index
    %c0_0 = arith.constant 0 : index
    %0 = vector.load %arg1[%c0, %c0_0] : memref<8x1xf32, #tpu.memory_space<vmem>>, vector<8x1xf32>
    %1 = tpu.iota {dimensions = array<i32: 1>} : vector<1x32xi32>
    %c16_i32 = arith.constant 16 : i32
    %2 = vector.broadcast %c16_i32 : i32 to vector<1x32xi32>
    %3 = arith.cmpi slt, %1, %2 : vector<1x32xi32>
    %c16_i32_1 = arith.constant 16 : i32
    %4 = vector.broadcast %c16_i32_1 : i32 to vector<1x32xi32>
    %5 = arith.subi %1, %4 : vector<1x32xi32>
    %6 = arith.select %3, %1, %5 : vector<1x32xi1>, vector<1x32xi32>
    %7 = arith.sitofp %6 : vector<1x32xi32> to vector<1x32xf32>
    %cst = arith.constant -0.614022672 : f32
    %8 = vector.broadcast %cst : f32 to vector<1x32xf32>
    %9 = arith.mulf %7, %8 : vector<1x32xf32>
    %10 = math.exp %9 : vector<1x32xf32>
    %cst_2 = arith.constant 0.000000e+00 : f32
    %cst_3 = arith.constant 1.57079637 : f32
    %11 = vector.broadcast %cst_2 : f32 to vector<1x32xf32>
    %12 = vector.broadcast %cst_3 : f32 to vector<1x32xf32>
    %13 = arith.select %3, %11, %12 : vector<1x32xi1>, vector<1x32xf32>
    %14 = vector.broadcast %0 : vector<8x1xf32> to vector<8x32xf32>
    %15 = vector.broadcast %10 : vector<1x32xf32> to vector<8x32xf32>
    %16 = arith.mulf %14, %15 : vector<8x32xf32>
    %17 = vector.broadcast %13 : vector<1x32xf32> to vector<8x32xf32>
    %18 = arith.addf %16, %17 : vector<8x32xf32>
    %19 = math.sin %18 : vector<8x32xf32>
    %c0_4 = arith.constant 0 : index
    %c0_5 = arith.constant 0 : index
    %20 = vector.load %arg2[%c0_4, %c0_5] : memref<32x128xf32, #tpu.memory_space<vmem>>, vector<32x128xf32>
    %cst_6 = arith.constant dense<0.000000e+00> : vector<8x128xf32>
    %21 = tpu.matmul %19, %20, %cst_6 {dimension_numbers = #tpu.dot_dimension_numbers<[1], [0], [0], [1], [0, 0, 1, 1], [], []>} : vector<8x32xf32>, vector<32x128xf32>, vector<8x128xf32> -> vector<8x128xf32>
    %c0_7 = arith.constant 0 : index
    %c0_8 = arith.constant 0 : index
    %22 = vector.load %arg3[%c0_7, %c0_8] : memref<1x128xf32, #tpu.memory_space<vmem>>, vector<1x128xf32>
    %23 = vector.broadcast %22 : vector<1x128xf32> to vector<8x128xf32>
    %24 = arith.addf %21, %23 : vector<8x128xf32>
    %cst_9 = arith.constant 5.000000e-01 : f32
    %25 = vector.broadcast %cst_9 : f32 to vector<8x128xf32>
    %26 = arith.mulf %25, %24 : vector<8x128xf32>
    %27 = math.tanh %26 : vector<8x128xf32>
    %cst_10 = arith.constant 1.000000e+00 : f32
    %28 = vector.broadcast %cst_10 : f32 to vector<8x128xf32>
    %29 = arith.addf %27, %28 : vector<8x128xf32>
    %cst_11 = arith.constant 5.000000e-01 : f32
    %30 = vector.broadcast %cst_11 : f32 to vector<8x128xf32>
    %31 = arith.mulf %30, %29 : vector<8x128xf32>
    %c0_12 = arith.constant 0 : index
    %c0_13 = arith.constant 0 : index
    %32 = vector.load %arg4[%c0_12, %c0_13] : memref<128x128xf32, #tpu.memory_space<vmem>>, vector<128x128xf32>
    %cst_14 = arith.constant dense<0.000000e+00> : vector<8x128xf32>
    %33 = tpu.matmul %31, %32, %cst_14 {dimension_numbers = #tpu.dot_dimension_numbers<[1], [0], [0], [1], [0, 0, 1, 1], [], []>} : vector<8x128xf32>, vector<128x128xf32>, vector<8x128xf32> -> vector<8x128xf32>
    %c0_15 = arith.constant 0 : index
    %c0_16 = arith.constant 0 : index
    %34 = vector.load %arg5[%c0_15, %c0_16] : memref<1x128xf32, #tpu.memory_space<vmem>>, vector<1x128xf32>
    %35 = vector.broadcast %34 : vector<1x128xf32> to vector<8x128xf32>
    %36 = arith.addf %33, %35 : vector<8x128xf32>
    %c0_17 = arith.constant 0 : index
    %c0_18 = arith.constant 0 : index
    %37 = vector.load %arg6[%c0_17, %c0_18] : memref<8x128xf32, #tpu.memory_space<vmem>>, vector<8x128xf32>
    tpu.vector_store %arg6[%c0_17, %c0_18], %36 {strides = array<i32>} : memref<8x128xf32, #tpu.memory_space<vmem>>, vector<8x128xf32>,
    return
  }
  func.func @transform_0(%arg0: i32) -> (i32, i32) {
    %c0_i32 = arith.constant 0 : i32
    %c0_i32_0 = arith.constant 0 : i32
    return %arg0, %c0_i32 : i32, i32
  }
  func.func @transform_1(%arg0: i32) -> (i32, i32) {
    %c0_i32 = arith.constant 0 : i32
    %c0_i32_0 = arith.constant 0 : i32
    %c0_i32_1 = arith.constant 0 : i32
    return %c0_i32, %c0_i32_0 : i32, i32
  }
  func.func @transform_2(%arg0: i32) -> (i32, i32) {
    %c0_i32 = arith.constant 0 : i32
    %c0_i32_0 = arith.constant 0 : i32
    %c0_i32_1 = arith.constant 0 : i32
    return %c0_i32, %c0_i32_0 : i32, i32
  }
  func.func @transform_3(%arg0: i32) -> (i32, i32) {
    %c0_i32 = arith.constant 0 : i32
    %c0_i32_0 = arith.constant 0 : i32
    %c0_i32_1 = arith.constant 0 : i32
    return %c0_i32, %c0_i32_0 : i32, i32
  }
  func.func @transform_4(%arg0: i32) -> (i32, i32) {
    %c0_i32 = arith.constant 0 : i32
    %c0_i32_0 = arith.constant 0 : i32
    %c0_i32_1 = arith.constant 0 : i32
    return %c0_i32, %c0_i32_0 : i32, i32
  }
  func.func @transform_5(%arg0: i32) -> (i32, i32) {
    %c0_i32 = arith.constant 0 : i32
    %c0_i32_0 = arith.constant 0 : i32
    return %arg0, %c0_i32 : i32, i32
  }
}

</mosaic_0001>

<llo_original>
// kernel: tpu_custom_call.1
$region0: #{tpu_custom_call.1}
  #allocation0 [shape = 'u32[]', space=smem, size = 0x4, offset = 0x4, fixed_abs, tag = 'smem constant byte address 0x4 - core index']
  #allocation1 [shape = 'u32[72,128]{1,0:T(1,128)}', space=vmem, size = 0x9000, scoped, tag = 'internal scratch']
  %s0 = inlined_call_operand.vmem [shape: f32[8,1], index: 0, kind: input, shape index: {}]
  %s1 = inlined_call_operand.hbm [shape: f32[32,128], index: 1, kind: input, shape index: {}]
  %s2 = inlined_call_operand.vmem [shape: f32[1,128], index: 2, kind: input, shape index: {}]
  %s3 = inlined_call_operand.hbm [shape: f32[128,128], index: 3, kind: input, shape index: {}]
  %s4 = inlined_call_operand.vmem [shape: f32[1,128], index: 4, kind: input, shape index: {}]
  %s5 = inlined_call_operand.hbm [shape: f32[8,128], index: 5, kind: output, shape index: {}]
  %s6 = sld [smem:[#allocation0]]
  $region38: #{tpu_custom_call.1} parent=0
    _
  %s8 = ssub.s32 1, %s6
  %s9 = scalar_select 0, %s8, %s6
  $region1: #{tpu_custom_call.1} parent=0
    #allocation2 [shape = 'u8[16384]{0}', space=vmem, size = 0x4000, scoped, tag = 'input window, operand 1, single buffered']
    #allocation3 [shape = 's32[1]{0}', space=sflag, size = 0x4, scoped, tag = 'scoped memory for tpu_custom_call.1']
    #allocation4 [shape = 's32[1]{0}', space=sflag, size = 0x4, scoped, tag = 'scoped memory for tpu_custom_call.1']
    #allocation5 [shape = 'u8[65536]{0}', space=vmem, size = 0x10000, scoped, tag = 'input window, operand 3, single buffered']
    #allocation6 [shape = 's32[1]{0}', space=sflag, size = 0x4, scoped, tag = 'scoped memory for tpu_custom_call.1']
    #allocation7 [shape = 'u8[4096]{0}', space=vmem, size = 0x1000, scoped, tag = 'output window, operand 0, single buffered']
    %10 = vsyncpa [#allocation3], 0
    %11 = vsyncpa [#allocation6], 0
    %12 = vsyncpa [#allocation4], 0
    // Predicated region
    $region2: #{tpu_custom_call.1} parent=1 // pred_check
      _
    $region3: #{tpu_custom_call.1} parent=1 // pred_check_branch
      %14 = sbr.rel (0) target = $region5
    $region4: #{tpu_custom_call.1} parent=1 // pred_region
      _
    $region5: #{tpu_custom_call.1} parent=1 // pred_fallthru
      _
    // Predicated region
    $region6: #{tpu_custom_call.1} parent=1 // pred_check
      _
    $region7: #{tpu_custom_call.1} parent=1 // pred_check_branch
      %16 = sbr.rel (0) target = $region9
    $region8: #{tpu_custom_call.1} parent=1 // pred_region
      %18 = vsyncadd [#allocation3], 0
      %s19 = sshll.u32 %s1, 4
      %s20 = int_to_ptr.hbm [resolvable:$true] %s19
      %s21 = sshll.u32 [#allocation2], 4
      %s22 = int_to_ptr.vmem [resolvable:$true] %s21
      %27 = dma.hbm_to_vmem [thread:$0]  %s20, 512, %s22, [#allocation3], 128, 128, 8
    $region9: #{tpu_custom_call.1} parent=1 // pred_fallthru
      _
    // Predicated region
    $region10: #{tpu_custom_call.1} parent=1 // pred_check
      _
    $region11: #{tpu_custom_call.1} parent=1 // pred_check_branch
      %29 = sbr.rel (0) target = $region13
    $region12: #{tpu_custom_call.1} parent=1 // pred_region
      _
    $region13: #{tpu_custom_call.1} parent=1 // pred_fallthru
      _
    // Predicated region
    $region14: #{tpu_custom_call.1} parent=1 // pred_check
      _
    $region15: #{tpu_custom_call.1} parent=1 // pred_check_branch
      %31 = sbr.rel (0) target = $region17
    $region16: #{tpu_custom_call.1} parent=1 // pred_region
      %33 = vsyncadd [#allocation6], 0
      %s34 = sshll.u32 %s3, 4
      %s35 = int_to_ptr.hbm [resolvable:$true] %s34
      %s36 = sshll.u32 [#allocation5], 4
      %s37 = int_to_ptr.vmem [resolvable:$true] %s36
      %42 = dma.hbm_to_vmem [thread:$0]  %s35, 2048, %s37, [#allocation6], 128, 128, 8
    $region17: #{tpu_custom_call.1} parent=1 // pred_fallthru
      _
    // Predicated region
    $region18: #{tpu_custom_call.1} parent=1 // pred_check
      _
    $region19: #{tpu_custom_call.1} parent=1 // pred_check_branch
      %44 = sbr.rel (0) target = $region21
    $region20: #{tpu_custom_call.1} parent=1 // pred_region
      _
    $region21: #{tpu_custom_call.1} parent=1 // pred_fallthru
      _
    // Predicated region
    $region22: #{tpu_custom_call.1} parent=1 // pred_check
      _
    $region23: #{tpu_custom_call.1} parent=1 // pred_check_branch
      %46 = sbr.rel (0) target = $region25
    $region24: #{tpu_custom_call.1} parent=1 // pred_region
      %48 = dma.done [#allocation3], 512
    $region25: #{tpu_custom_call.1} parent=1 // pred_fallthru
      _
    // Predicated region
    $region26: #{tpu_custom_call.1} parent=1 // pred_check
      _
    $region27: #{tpu_custom_call.1} parent=1 // pred_check_branch
      %50 = sbr.rel (0) target = $region29
    $region28: #{tpu_custom_call.1} parent=1 // pred_region
      %52 = dma.done [#allocation6], 2048
    $region29: #{tpu_custom_call.1} parent=1 // pred_fallthru
      _
    %v53 = vld [vmem:[%s0] sm:$0xff]
    %v54 = vlaneseq
    %v55 = vand.u32 %v54, 127
    %vm56 = vcmp.lt.s32.totalorder %v55, 16
    %v57 = vsub.s32 %v55, 16
    %v58 = vsel %vm56, %v55, %v57
    %v59 = vcvt.s32.f32 %v58
    %v60 = vmul.f32 %v59, -0.6140227
    %v61 = vmul.f32 %v60, 1.442695
    %v62 = vpow.pop %v61
    %v63 = vsel %vm56, 0.0, 1.5707964
    %65 = vset.pattern.permute.xlu0 0
    %66 = vperm.xlu0 %65, %v53
    %v67 = vpop.permute.xlu0 %66
    %v69 = vmul.f32 %v67, %v62
    %v70 = vadd.f32 %v69, %v63
    %v71 = vand.u32 2147483647, %v70
    %vm72 = vcmp.le.f32.partialorder %v71, 0.7853982
    %vm73 = vcmp.lt.s32.totalorder %v70, 0
    %v74 = vand.u32 %v70, 2139095040
    %v75 = vshrl.u32 %v74, 23
    %v76 = vsub.s32 %v75, 127
    %v77 = vand.u32 2147483647, %v70
    %v78 = vand.u32 %v77, 8388607
    %v79 = vor.u32 %v78, 8388608
    %v80 = vsub.s32 0, %v79
    %v81 = vadd.s32 %v76, 1
    %vm82 = vcmp.gt.s32.totalorder %v81, 0
    %v83 = vsel %vm82, %v81, 0
    %v84 = vshrl.u32 %v83, 5
    %v85 = vand.u32 %v83, 31
    %v86 = vsub.s32 32, %v85
    %v87 = vshrl.u32 683565275, %v86
    %v88 = vshll.u32 683565275, %v85
    %v89 = vshrl.u32 2475754826, %v86
    %v90 = vor.u32 %v88, %v89
    %v91 = vshll.u32 2475754826, %v85
    %v92 = vshrl.u32 2131351028, %v86
    %v93 = vor.u32 %v91, %v92
    %v94 = vshll.u32 2131351028, %v85
    %v95 = vshrl.u32 2102212464, %v86
    %v96 = vor.u32 %v94, %v95
    %v97 = vshll.u32 2102212464, %v85
    %v98 = vshrl.u32 920167782, %v86
    %v99 = vor.u32 %v97, %v98
    %v100 = vshll.u32 920167782, %v85
    %v101 = vshrl.u32 1326507024, %v86
    %v102 = vor.u32 %v100, %v101
    %vm103 = vcmp.lt.s32.totalorder %v84, 1
    %vm104 = vcmp.lt.s32.totalorder %v84, 2
    %vm105 = vcmp.lt.s32.totalorder %v84, 3
    %vm106 = vcmp.lt.s32.totalorder %v84, 4
    %v107 = vsel %vm103, %v87, %v90
    %v108 = vsel %vm106, %v96, 2102212464
    %v109 = vsel %vm105, %v93, %v108
    %v110 = vsel %vm104, %v107, %v109
    %v111 = vsel %vm103, %v90, %v93
    %v112 = vsel %vm106, %v99, 920167782
    %v113 = vsel %vm105, %v96, %v112
    %v114 = vsel %vm104, %v111, %v113
    %v115 = vsel %vm103, %v93, %v96
    %v116 = vsel %vm106, %v102, 1326507024
    %v117 = vsel %vm105, %v99, %v116
    %v118 = vsel %vm104, %v115, %v117
    %v119 = vshll.u32 %v79, 8
    %v120 = vand.u32 %v119, 65535
    %v121 = vshrl.u32 %v119, 16
    %v122 = vand.u32 %v118, 65535
    %v123 = vshrl.u32 %v118, 16
    %v124 = vmul.u32 %v120, %v122
    %v125 = vmul.u32 %v120, %v123
    %v126 = vmul.u32 %v121, %v122
    %v127 = vmul.u32 %v121, %v123
    %v128 = vshll.u32 %v125, 16
    %v129 = vshrl.u32 %v125, 16
    %v130 = vshll.u32 %v126, 16
    %v131 = vshrl.u32 %v126, 16
    %vm132 = vc.u32 %v124, %v128
    %v133 = vsel %vm132, 1, 0
    %v134 = vadd.s32 %v124, %v128
    %v135 = vadd.s32 %v127, %v133
    %vm136 = vc.u32 %v134, %v130
    %v137 = vsel %vm136, 1, 0
    %v138 = vadd.s32 %v134, %v130
    %v139 = vadd.s32 %v135, %v137
    %v140 = vadd.s32 %v139, %v129
    %v141 = vadd.s32 %v140, %v131
    %v142 = vand.u32 %v119, 65535
    %v143 = vshrl.u32 %v119, 16
    %v144 = vand.u32 %v114, 65535
    %v145 = vshrl.u32 %v114, 16
    %v146 = vmul.u32 %v142, %v144
    %v147 = vmul.u32 %v142, %v145
    %v148 = vmul.u32 %v143, %v144
    %v149 = vmul.u32 %v143, %v145
    %v150 = vshll.u32 %v147, 16
    %v151 = vshrl.u32 %v147, 16
    %v152 = vshll.u32 %v148, 16
    %v153 = vshrl.u32 %v148, 16
    %vm154 = vc.u32 %v146, %v150
    %v155 = vsel %vm154, 1, 0
    %v156 = vadd.s32 %v146, %v150
    %v157 = vadd.s32 %v149, %v155
    %vm158 = vc.u32 %v156, %v152
    %v159 = vsel %vm158, 1, 0
    %v160 = vadd.s32 %v156, %v152
    %v161 = vadd.s32 %v157, %v159
    %v162 = vadd.s32 %v161, %v151
    %v163 = vadd.s32 %v162, %v153
    %v164 = vmul.u32 %v119, %v110
    %v165 = vadd.s32 %v141, %v160
    %vm166 = vc.u32 %v141, %v160
    %v167 = vadd.s32 %v163, 1
    %v168 = vsel %vm166, %v167, %v163
    %v169 = vadd.s32 %v164, %v168
    %v170 = vadd.s32 %v169, 536870912
    %v171 = vshrl.u32 %v170, 30
    %v172 = vshll.u32 %v171, 30
    %v173 = vsub.s32 %v169, %v172
    %vm174 = vcmp.lt.s32.totalorder %v173, 0
    %v175 = vsub.s32 0, %v173
    %v176 = vsel %vm174, %v175, %v173
    %v177 = vclz %v176
    %v178 = vsub.s32 %v177, 2
    %vm179 = vcmp.gt.s32.totalorder 0, %v178
    %v180 = vsel %vm179, 0, %v178
    %v181 = vsub.s32 32, %v180
    %v182 = vshll.u32 %v173, %v180
    %v183 = vshrl.u32 %v165, %v181
    %v184 = vor.u32 %v182, %v183
    %v185 = vsub.s32 4294967266, %v180
    %v186 = vadd.s32 %v185, 127
    %v187 = vshll.u32 %v186, 23
    %v188 = vor.u32 4788187, %v187
    %v189 = vand.u32 2147483647, %v188
    %v191 = vcvt.s32.f32 %v184
    %v192 = vmul.f32 %v191, %v189
    %v193 = vxor.u32 %v192, 2147483648
    %v194 = vsel %vm73, %v193, %v192
    %v195 = vsub.s32 4, %v171
    %v196 = vsel %vm73, %v195, %v171
    %v197 = vsel %vm72, %v70, %v194
    %v198 = vsel %vm72, 0, %v196
    %v199 = vmul.f32 %v197, %v197
    %v200 = vmul.f32 %v199, -0.001358992
    %v201 = vadd.f32 %v200, 0.041655596
    %v202 = vmul.f32 %v199, %v201
    %v203 = vadd.f32 %v202, -0.4999988
    %v204 = vmul.f32 %v199, %v203
    %v205 = vadd.f32 1.0, %v204
    %v206 = vmul.f32 %v197, %v197
    %v207 = vmul.f32 %v206, -0.00019511016
    %v208 = vadd.f32 %v207, 0.008332121
    %v209 = vmul.f32 %v206, %v208
    %v210 = vadd.f32 %v209, -0.16666654
    %v211 = vmul.f32 %v206, %v210
    %v212 = vadd.f32 %v211, 1.0
    %v213 = vmul.f32 %v212, %v197
    %vm214 = vweird.f32 %v70
    %v215 = vadd.s32 %v198, 3
    %v216 = vand.u32 %v215, 3
    %vm217 = vcmp.lt.s32.totalorder %v216, 2
    %vm218 = vcmp.eq.s32.totalorder %v216, 0
    %v219 = vxor.u32 %v213, 2147483648
    %v220 = vsel %vm218, %v205, %v219
    %vm221 = vcmp.eq.s32.totalorder %v216, 2
    %v222 = vxor.u32 %v205, 2147483648
    %v223 = vsel %vm221, %v222, %v213
    %v224 = vsel %vm217, %v220, %v223
    %v225 = vsel %vm214, nan, %v224
    %v226 = vld [vmem:[#allocation2] sm:$0xff]
    %v227 = vld [vmem:[#allocation2 + $0x8] sm:$0xff]
    %v228 = vld [vmem:[#allocation2 + $0x10] sm:$0xff]
    %v229 = vld [vmem:[#allocation2 + $0x18] sm:$0xff]
    %v230 = vld [vmem:[%s2] sm:$0x1]
    %v232 = vperm.slane %v230, 0
    %vm234 = vcmask 261120
    %v236 = vsel %vm234, %v225, 0
    %238 = vmatpush.msra.mxu0 0.0
    %239 = vmatpush.msra.mxu0 0.0
    %240 = vmatpush.msra.mxu0 0.0
    %241 = vmatpush.msra.mxu0 0.0
    %242 = vmatpush.msra.mxu0 0.0
    %243 = vmatpush.msra.mxu0 0.0
    %244 = vmatpush.msra.mxu0 0.0
    %245 = vmatpush.msra.mxu0 0.0
    %246 = vmatpush.msra.mxu0 0.0
    %247 = vmatpush.msra.mxu0 0.0
    %248 = vmatpush.msra.mxu0 0.0
    %249 = vmatpush.msra.mxu0 0.0
    %250 = vmatpush.msra.mxu0 %v229
    %251 = vmatpush.msra.mxu0 %v228
    %252 = vmatpush.msra.mxu0 %v227
    %253 = vmatpush.msra.mxu0 %v226
    %254 = vmatmul.f32.gmra.mxu0 %v236
    %v255 = vpop.f32.mrf.mxu0
    %v256 = vadd.f32 %v232, %v255
    %257 = vdwg.mxu0
    %v258 = vmul.f32 %v256, 0.5
    %v259 = vtanh.pop %v258
    %v260 = vadd.f32 %v259, 1.0
    %v261 = vmul.f32 %v260, 0.5
    %v262 = vld [vmem:[#allocation5] sm:$0xff]
    %v263 = vld [vmem:[#allocation5 + $0x8] sm:$0xff]
    %v264 = vld [vmem:[#allocation5 + $0x10] sm:$0xff]
    %v265 = vld [vmem:[#allocation5 + $0x18] sm:$0xff]
    %v266 = vld [vmem:[#allocation5 + $0x20] sm:$0xff]
    %v267 = vld [vmem:[#allocation5 + $0x28] sm:$0xff]
    %v268 = vld [vmem:[#allocation5 + $0x30] sm:$0xff]
    %v269 = vld [vmem:[#allocation5 + $0x38] sm:$0xff]
    %v270 = vld [vmem:[#allocation5 + $0x40] sm:$0xff]
    %v271 = vld [vmem:[#allocation5 + $0x48] sm:$0xff]
    %v272 = vld [vmem:[#allocation5 + $0x50] sm:$0xff]
    %v273 = vld [vmem:[#allocation5 + $0x58] sm:$0xff]
    %v274 = vld [vmem:[#allocation5 + $0x60] sm:$0xff]
    %v275 = vld [vmem:[#allocation5 + $0x68] sm:$0xff]
    %v276 = vld [vmem:[#allocation5 + $0x70] sm:$0xff]
    %v277 = vld [vmem:[#allocation5 + $0x78] sm:$0xff]
    %v278 = vld [vmem:[%s4] sm:$0x1]
    %v280 = vperm.slane %v278, 0
    %282 = vmatpush.msra.mxu0 %v277
    %283 = vmatpush.msra.mxu0 %v276
    %284 = vmatpush.msra.mxu0 %v275
    %285 = vmatpush.msra.mxu0 %v274
    %286 = vmatpush.msra.mxu0 %v273
    %287 = vmatpush.msra.mxu0 %v272
    %288 = vmatpush.msra.mxu0 %v271
    %289 = vmatpush.msra.mxu0 %v270
    %290 = vmatpush.msra.mxu0 %v269
    %291 = vmatpush.msra.mxu0 %v268
    %292 = vmatpush.msra.mxu0 %v267
    %293 = vmatpush.msra.mxu0 %v266
    %294 = vmatpush.msra.mxu0 %v265
    %295 = vmatpush.msra.mxu0 %v264
    %296 = vmatpush.msra.mxu0 %v263
    %297 = vmatpush.msra.mxu0 %v262
    %298 = vmatmul.f32.gmra.mxu0 %v261
    %v299 = vpop.f32.mrf.mxu0
    %v300 = vadd.f32 %v280, %v299
    %301 = vdwg.mxu0
    %302 = vst [vmem:[#allocation7] sm:$0xff] %v300
    // Predicated region
    $region30: #{tpu_custom_call.1} parent=1 // pred_check
      _
    $region31: #{tpu_custom_call.1} parent=1 // pred_check_branch
      %304 = sbr.rel (0) target = $region33
    $region32: #{tpu_custom_call.1} parent=1 // pred_region
      %306 = vsyncadd [#allocation4], 0
      %s308 = sshll.u32 [#allocation7], 4
      %s309 = int_to_ptr.vmem [resolvable:$true] %s308
      %s310 = sshll.u32 %s5, 4
      %s311 = int_to_ptr.hbm [resolvable:$true] %s310
      %313 = dma.vmem_to_hbm [thread:$0]  %s309, 128, %s311, [#allocation4]
    $region33: #{tpu_custom_call.1} parent=1 // pred_fallthru
      _
    // Predicated region
    $region34: #{tpu_custom_call.1} parent=1 // pred_check
      _
    $region35: #{tpu_custom_call.1} parent=1 // pred_check_branch
      %315 = sbr.rel (0) target = $region37
    $region36: #{tpu_custom_call.1} parent=1 // pred_region
      %317 = dma.done [#allocation4], 128
    $region37: #{tpu_custom_call.1} parent=1 // pred_fallthru
      _
    %318 = vsyncpa [#allocation3], 1
    %319 = vsyncpa [#allocation6], 1
    %320 = vsyncpa [#allocation4], 1

</llo_original>
